<compile_context>
chip_gen: v5e
topology: v5e:2x2
jax: 0.10.0
libtpu: 0.0.40
codegen_flags: <defaults>
</compile_context>

<pallas_src>
import functools

import numpy as np

import jax
import jax.numpy as jnp
from jax.experimental import pallas as pl
from jax.experimental.pallas import tpu as pltpu


def _round_up(x, m):
    return (x + m - 1) // m * m


# ----------------------------------------------------------------------------
# Pallas kernel: full USAD forward for one batch tile
# ----------------------------------------------------------------------------
def usad_kernel(x_ref, wslab_ref, bslab_ref, out_ref, *, pad, enc_in, fused):
    """
    x_ref:     (tb, enc_in)  bf16 flattened window (no lane padding)
    wslab_ref: (S*pad, pad)  bf16 weight slab.
               fused (S=6):  slots 0..2 encoder; slots 3..5 hold decoder1
                             (top-left block) and decoder2 (block at lane
                             offset pad//2; its layer-0 shares input rows with
                             decoder1 so a single z drives both).
               plain (S=9):  slots 0..2 enc, 3..5 dec1, 6..8 dec2.
    bslab_ref: (S, pad)      f32 biases, matching layout.
    out_ref:   fused: (tb, 2*pad)  [ w1|w2 slab | .|w3 slab ]
               plain: (tb, 3*pad)  [ w1 | w2 | w3 ]
    """
    half = pad // 2

    def linear(h, i):
        w = wslab_ref[pl.ds(i * pad, pad), :]                    # bf16 (pad, pad)
        b = bslab_ref[pl.ds(i, 1), :]                            # f32  (1, pad)
        return jnp.dot(h.astype(jnp.bfloat16), w,
                       preferred_element_type=jnp.float32) + b

    def relu_linear(h, i):
        return jnp.maximum(linear(h, i), 0.0)

    def sigmoid(h):
        # tanh runs on the EUP slot (co-issues with VPU/MXU work)
        return 0.5 * (jnp.tanh(0.5 * h) + 1.0)

    def encoder(h, k0):
        # First layer reads only the first k0 rows of weight slot 0; rows
        # [enc_in:pad] are zero so feeding a full-pad activation is equivalent.
        w0 = wslab_ref[pl.ds(0, k0), :]
        b0 = bslab_ref[pl.ds(0, 1), :]
        h = jnp.maximum(
            jnp.dot(h.astype(jnp.bfloat16), w0,
                    preferred_element_type=jnp.float32) + b0, 0.0)
        h = relu_linear(h, 1)
        return relu_linear(h, 2)                 # activation_after_last_layer=True

    def decoder(h, base):
        h = relu_linear(h, base)
        h = relu_linear(h, base + 1)
        return sigmoid(linear(h, base + 2))      # no ReLU on last layer; sigmoid

    x = x_ref[...]                               # bf16 (tb, enc_in)
    z = encoder(x, enc_in)                       # f32 (tb, pad); zero outside [0:latent]

    if fused:
        # Pass A: one trip through the fused tiles gives both decoders:
        #   lanes [0:enc_in]          = decoder1(z) = w1
        #   lanes [half:half+enc_in]  = decoder2(z) = w2
        wa = decoder(z, 3)
        # encoder weight rows >= enc_in are zero, so encoder(wa) == encoder(w1).
        z3 = encoder(wa, pad)
        # Pass B: dec2 half gives w3 at [half:half+enc_in]; dec1 half is unused.
        wb = decoder(z3, 3)
        out_ref[:, pl.ds(0, pad)] = wa.astype(out_ref.dtype)
        out_ref[:, pl.ds(pad, pad)] = wb.astype(out_ref.dtype)
    else:
        # TODO(synk): fallback path (decoder dims > pad//2) — stream per-layer
        # row offsets instead of uniform (pad,pad) tiles if the slab nears VMEM.
        w1 = decoder(z, 3)
        w2 = decoder(z, 6)
        z3 = encoder(w1, pad)
        w3 = decoder(z3, 6)
        out_ref[:, pl.ds(0, pad)] = w1.astype(out_ref.dtype)
        out_ref[:, pl.ds(pad, pad)] = w2.astype(out_ref.dtype)
        out_ref[:, pl.ds(2 * pad, pad)] = w3.astype(out_ref.dtype)


# ----------------------------------------------------------------------------
# Host-side packing (hoist this out of the per-call path)
# ----------------------------------------------------------------------------
def pack_params(params):
    """Pack the 9 (weight, bias) pairs into one bf16 weight slab + f32 bias slab."""
    enc_layers = list(params["enc"])
    d1 = list(params["dec1"])
    d2 = list(params["dec2"])

    dims = []
    for (w, _) in enc_layers + d1 + d2:
        dims += [w.shape[0], w.shape[1]]
    pad = _round_up(max(dims), 128)
    half = pad // 2

    dec_dims = []
    for (w, _) in d1 + d2:
        dec_dims += [w.shape[0], w.shape[1]]
    fused = max(dec_dims) <= half                 # both decoders fit side-by-side

    n_slots = 6 if fused else 9
    wslab = np.zeros((n_slots * pad, pad), np.float32)
    bslab = np.zeros((n_slots, pad), np.float32)

    def put(slot, w, b, roff, coff):
        w = np.asarray(w, np.float32)
        b = np.asarray(b, np.float32).reshape(-1)
        fin, fout = w.shape
        wslab[slot * pad + roff: slot * pad + roff + fin, coff: coff + fout] = w
        bslab[slot, coff: coff + fout] = b

    for i, (w, b) in enumerate(enc_layers):                       # slots 0..2
        put(i, w, b, 0, 0)

    if fused:
        for i, (w, b) in enumerate(d1):                           # top-left blocks
            put(3 + i, w, b, 0, 0)
        for i, (w, b) in enumerate(d2):
            # layer 0 of dec2 reads the SAME input lanes as dec1 (the shared z)
            # but writes lanes [half:]; deeper layers are block-diagonal.
            roff = 0 if i == 0 else half
            put(3 + i, w, b, roff, half)
    else:
        for i, (w, b) in enumerate(d1):
            put(3 + i, w, b, 0, 0)
        for i, (w, b) in enumerate(d2):
            put(6 + i, w, b, 0, 0)

    return jnp.asarray(wslab, jnp.bfloat16), jnp.asarray(bslab, jnp.float32)


def _choose_batch_tile(B, batch_tile):
    if B <= 8:
        return B, B
    # >= 2 grid steps so ("parallel",) can use v7x's second TensorCore.
    tb = min(batch_tile, _round_up(-(-B // 2), 8))
    bp = _round_up(B, tb)
    return tb, bp


# ----------------------------------------------------------------------------
# Jitted forward on packed slabs
# ----------------------------------------------------------------------------
@functools.partial(jax.jit, static_argnames=("batch_tile",))
def usad_forward_packed(x, wslab, bslab, batch_tile=512):
    """x: (B, window_size, input_dim). Returns (w1, w2, w3), same shape as x."""
    B, W, D = x.shape
    enc_in = W * D
    pad = wslab.shape[1]
    half = pad // 2
    n_slots = bslab.shape[0]
    fused = n_slots == 6
    n_out = 2 if fused else 3

    tb, bp = _choose_batch_tile(B, batch_tile)

    x2d = x.reshape(B, enc_in).astype(jnp.bfloat16)
    if bp > B:
        x2d = jnp.pad(x2d, ((0, bp - B), (0, 0)))

    kernel = functools.partial(usad_kernel, pad=pad, enc_in=enc_in, fused=fused)

    out = pl.pallas_call(
        kernel,
        out_shape=jax.ShapeDtypeStruct((bp, n_out * pad), jnp.float32),
        grid=(bp // tb,),
        in_specs=[
            pl.BlockSpec((tb, enc_in), lambda i: (i, 0)),                 # x tile
            pl.BlockSpec((n_slots * pad, pad), lambda i: (0, 0)),         # weights (resident)
            pl.BlockSpec((n_slots, pad), lambda i: (0, 0)),               # biases  (resident)
        ],
        out_specs=pl.BlockSpec((tb, n_out * pad), lambda i: (i, 0)),
        compiler_params=pltpu.CompilerParams(
            dimension_semantics=("parallel",),
        ),
    )(x2d, wslab, bslab)

    if fused:
        w1 = out[:B, 0:enc_in]
        w2 = out[:B, half:half + enc_in]
        w3 = out[:B, pad + half:pad + half + enc_in]
    else:
        w1 = out[:B, 0:enc_in]
        w2 = out[:B, pad:pad + enc_in]
        w3 = out[:B, 2 * pad:2 * pad + enc_in]

    shp = (B, W, D)
    return w1.reshape(shp), w2.reshape(shp), w3.reshape(shp)


def usad_forward(x, params, *, batch_tile=512):
    """Convenience wrapper: packs params every call (prefer hoisting pack_params)."""
    wslab, bslab = pack_params(params)
    return usad_forward_packed(x, wslab, bslab, batch_tile=batch_tile)


# ----------------------------------------------------------------------------
# Deterministic parameter construction (synthetic init, not a checkpoint)
# ----------------------------------------------------------------------------
def init_linear(key, fan_in, fan_out):
    kw, kb = jax.random.split(key)
    scale = 1.0 / jnp.sqrt(jnp.float32(fan_in))
    w = jax.random.uniform(kw, (fan_in, fan_out), jnp.float32, -scale, scale)
    b = jax.random.uniform(kb, (1, fan_out), jnp.float32, -scale, scale)
    return w, b


def make_usad_params(key, input_dim, window_size, latent_dim, n_hidden_layers=2):
    enc_in = input_dim * window_size
    hidden = [enc_in // (2 ** i) for i in range(1, n_hidden_layers + 1)]   # e.g. [16, 8]

    enc_dims = [enc_in] + hidden + [latent_dim]
    dec_dims = [latent_dim] + hidden[::-1] + [enc_in]

    params = {"enc": [], "dec1": [], "dec2": []}
    keys = jax.random.split(key, 9)
    k = 0
    for i in range(len(enc_dims) - 1):
        params["enc"].append(init_linear(keys[k], enc_dims[i], enc_dims[i + 1])); k += 1
    for i in range(len(dec_dims) - 1):
        params["dec1"].append(init_linear(keys[k], dec_dims[i], dec_dims[i + 1])); k += 1
    for i in range(len(dec_dims) - 1):
        params["dec2"].append(init_linear(keys[k], dec_dims[i], dec_dims[i + 1])); k += 1
    return params


# ----------------------------------------------------------------------------
# Pure-JAX f32 reference for correctness check
# ----------------------------------------------------------------------------
def usad_forward_ref(x, params):
    B, W, D = x.shape
    h = x.reshape(B, W * D)

    def enc(h):
        for (w, b) in params["enc"]:
            h = jnp.maximum(h @ w + b, 0.0)
        return h

    def dec(h, layers):
        for (w, b) in layers[:-1]:
            h = jnp.maximum(h @ w + b, 0.0)
        w, b = layers[-1]
        return jax.nn.sigmoid(h @ w + b)

    z = enc(h)
    w1 = dec(z, params["dec1"])
    w2 = dec(z, params["dec2"])
    w3 = dec(enc(w1), params["dec2"])
    return (w1.reshape(x.shape), w2.reshape(x.shape), w3.reshape(x.shape))


if __name__ == "__main__":
    # Small shapes consistent with the module: batch=2, window_size=8, input_dim=4
    B, W, D = 2, 8, 4
    latent_dim = 8

    key = jax.random.PRNGKey(0)
    k_x, k_p = jax.random.split(key)
    x = jax.random.uniform(k_x, (B, W, D), jnp.float32)    # (b, window_size, n_nodes)
    params = make_usad_params(k_p, input_dim=D, window_size=W, latent_dim=latent_dim)

    # Pack once (hoisted), run the jitted packed forward.
    wslab, bslab = pack_params(params)
    w1, w2, w3 = usad_forward_packed(x, wslab, bslab)
    jax.block_until_ready((w1, w2, w3))

    r1, r2, r3 = usad_forward_ref(x, params)
    assert w1.shape == x.shape and w2.shape == x.shape and w3.shape == x.shape
    # bf16 MXU operands vs f32 reference -> relaxed tolerance.
    assert jnp.allclose(w1, r1, atol=2e-2), "w1 mismatch"
    assert jnp.allclose(w2, r2, atol=2e-2), "w2 mismatch"
    assert jnp.allclose(w3, r3, atol=2e-2), "w3 mismatch"

    print("KERNEL_OK")
</pallas_src>

<mosaic_0001>
module attributes {stable_mosaic.version = 11 : i64} {
  func.func @usad_kernel(%arg0: i32, %arg1: memref<2x32xbf16, #tpu.memory_space<vmem>>, %arg2: memref<768x128xbf16, #tpu.memory_space<vmem>>, %arg3: memref<6x128xf32, #tpu.memory_space<vmem>>, %arg4: memref<2x256xf32, #tpu.memory_space<vmem>>) attributes {dimension_semantics = [#tpu.dimension_semantics<parallel>], iteration_bounds = array<i64: 1>, scalar_prefetch = 0 : i64, scratch_operands = 0 : i64, tpu.core_type = #tpu.core_type<tc>, window_params = [{transform_indices = @transform_0, window_bounds = array<i64: 2, 32>}, {pipeline_mode = #tpu.pipeline_mode<synchronous>, transform_indices = @transform_1, window_bounds = array<i64: 768, 128>}, {pipeline_mode = #tpu.pipeline_mode<synchronous>, transform_indices = @transform_2, window_bounds = array<i64: 6, 128>}, {transform_indices = @transform_3, window_bounds = array<i64: 2, 256>}]} {
    %c0 = arith.constant 0 : index
    %c0_0 = arith.constant 0 : index
    %0 = vector.load %arg1[%c0, %c0_0] : memref<2x32xbf16, #tpu.memory_space<vmem>>, vector<2x32xbf16>
    %c0_1 = arith.constant 0 : index
    %c0_2 = arith.constant 0 : index
    %1 = vector.load %arg2[%c0_1, %c0_2] : memref<768x128xbf16, #tpu.memory_space<vmem>>, vector<32x128xbf16>
    %c0_3 = arith.constant 0 : index
    %c0_4 = arith.constant 0 : index
    %2 = vector.load %arg3[%c0_3, %c0_4] : memref<6x128xf32, #tpu.memory_space<vmem>>, vector<1x128xf32>
    %cst = arith.constant dense<0.000000e+00> : vector<2x128xf32>
    %3 = tpu.matmul %0, %1, %cst {dimension_numbers = #tpu.dot_dimension_numbers<[1], [0], [0], [1], [0, 0, 1, 1], [], []>} : vector<2x32xbf16>, vector<32x128xbf16>, vector<2x128xf32> -> vector<2x128xf32>
    %4 = vector.broadcast %2 : vector<1x128xf32> to vector<2x128xf32>
    %5 = arith.addf %3, %4 : vector<2x128xf32>
    %cst_5 = arith.constant 0.000000e+00 : f32
    %6 = vector.broadcast %cst_5 : f32 to vector<2x128xf32>
    %7 = arith.maximumf %5, %6 : vector<2x128xf32>
    %c128 = arith.constant 128 : index
    %c0_6 = arith.constant 0 : index
    %8 = vector.load %arg2[%c128, %c0_6] : memref<768x128xbf16, #tpu.memory_space<vmem>>, vector<128x128xbf16>
    %c1 = arith.constant 1 : index
    %c0_7 = arith.constant 0 : index
    %9 = vector.load %arg3[%c1, %c0_7] : memref<6x128xf32, #tpu.memory_space<vmem>>, vector<1x128xf32>
    %10 = arith.truncf %7 : vector<2x128xf32> to vector<2x128xbf16>
    %cst_8 = arith.constant dense<0.000000e+00> : vector<2x128xf32>
    %11 = tpu.matmul %10, %8, %cst_8 {dimension_numbers = #tpu.dot_dimension_numbers<[1], [0], [0], [1], [0, 0, 1, 1], [], []>} : vector<2x128xbf16>, vector<128x128xbf16>, vector<2x128xf32> -> vector<2x128xf32>
    %12 = vector.broadcast %9 : vector<1x128xf32> to vector<2x128xf32>
    %13 = arith.addf %11, %12 : vector<2x128xf32>
    %cst_9 = arith.constant 0.000000e+00 : f32
    %14 = vector.broadcast %cst_9 : f32 to vector<2x128xf32>
    %15 = arith.maximumf %13, %14 : vector<2x128xf32>
    %c256 = arith.constant 256 : index
    %c0_10 = arith.constant 0 : index
    %16 = vector.load %arg2[%c256, %c0_10] : memref<768x128xbf16, #tpu.memory_space<vmem>>, vector<128x128xbf16>
    %c2 = arith.constant 2 : index
    %c0_11 = arith.constant 0 : index
    %17 = vector.load %arg3[%c2, %c0_11] : memref<6x128xf32, #tpu.memory_space<vmem>>, vector<1x128xf32>
    %18 = arith.truncf %15 : vector<2x128xf32> to vector<2x128xbf16>
    %cst_12 = arith.constant dense<0.000000e+00> : vector<2x128xf32>
    %19 = tpu.matmul %18, %16, %cst_12 {dimension_numbers = #tpu.dot_dimension_numbers<[1], [0], [0], [1], [0, 0, 1, 1], [], []>} : vector<2x128xbf16>, vector<128x128xbf16>, vector<2x128xf32> -> vector<2x128xf32>
    %20 = vector.broadcast %17 : vector<1x128xf32> to vector<2x128xf32>
    %21 = arith.addf %19, %20 : vector<2x128xf32>
    %cst_13 = arith.constant 0.000000e+00 : f32
    %22 = vector.broadcast %cst_13 : f32 to vector<2x128xf32>
    %23 = arith.maximumf %21, %22 : vector<2x128xf32>
    %c384 = arith.constant 384 : index
    %c0_14 = arith.constant 0 : index
    %24 = vector.load %arg2[%c384, %c0_14] : memref<768x128xbf16, #tpu.memory_space<vmem>>, vector<128x128xbf16>
    %c3 = arith.constant 3 : index
    %c0_15 = arith.constant 0 : index
    %25 = vector.load %arg3[%c3, %c0_15] : memref<6x128xf32, #tpu.memory_space<vmem>>, vector<1x128xf32>
    %26 = arith.truncf %23 : vector<2x128xf32> to vector<2x128xbf16>
    %cst_16 = arith.constant dense<0.000000e+00> : vector<2x128xf32>
    %27 = tpu.matmul %26, %24, %cst_16 {dimension_numbers = #tpu.dot_dimension_numbers<[1], [0], [0], [1], [0, 0, 1, 1], [], []>} : vector<2x128xbf16>, vector<128x128xbf16>, vector<2x128xf32> -> vector<2x128xf32>
    %28 = vector.broadcast %25 : vector<1x128xf32> to vector<2x128xf32>
    %29 = arith.addf %27, %28 : vector<2x128xf32>
    %cst_17 = arith.constant 0.000000e+00 : f32
    %30 = vector.broadcast %cst_17 : f32 to vector<2x128xf32>
    %31 = arith.maximumf %29, %30 : vector<2x128xf32>
    %c512 = arith.constant 512 : index
    %c0_18 = arith.constant 0 : index
    %32 = vector.load %arg2[%c512, %c0_18] : memref<768x128xbf16, #tpu.memory_space<vmem>>, vector<128x128xbf16>
    %c4 = arith.constant 4 : index
    %c0_19 = arith.constant 0 : index
    %33 = vector.load %arg3[%c4, %c0_19] : memref<6x128xf32, #tpu.memory_space<vmem>>, vector<1x128xf32>
    %34 = arith.truncf %31 : vector<2x128xf32> to vector<2x128xbf16>
    %cst_20 = arith.constant dense<0.000000e+00> : vector<2x128xf32>
    %35 = tpu.matmul %34, %32, %cst_20 {dimension_numbers = #tpu.dot_dimension_numbers<[1], [0], [0], [1], [0, 0, 1, 1], [], []>} : vector<2x128xbf16>, vector<128x128xbf16>, vector<2x128xf32> -> vector<2x128xf32>
    %36 = vector.broadcast %33 : vector<1x128xf32> to vector<2x128xf32>
    %37 = arith.addf %35, %36 : vector<2x128xf32>
    %cst_21 = arith.constant 0.000000e+00 : f32
    %38 = vector.broadcast %cst_21 : f32 to vector<2x128xf32>
    %39 = arith.maximumf %37, %38 : vector<2x128xf32>
    %c640 = arith.constant 640 : index
    %c0_22 = arith.constant 0 : index
    %40 = vector.load %arg2[%c640, %c0_22] : memref<768x128xbf16, #tpu.memory_space<vmem>>, vector<128x128xbf16>
    %c5 = arith.constant 5 : index
    %c0_23 = arith.constant 0 : index
    %41 = vector.load %arg3[%c5, %c0_23] : memref<6x128xf32, #tpu.memory_space<vmem>>, vector<1x128xf32>
    %42 = arith.truncf %39 : vector<2x128xf32> to vector<2x128xbf16>
    %cst_24 = arith.constant dense<0.000000e+00> : vector<2x128xf32>
    %43 = tpu.matmul %42, %40, %cst_24 {dimension_numbers = #tpu.dot_dimension_numbers<[1], [0], [0], [1], [0, 0, 1, 1], [], []>} : vector<2x128xbf16>, vector<128x128xbf16>, vector<2x128xf32> -> vector<2x128xf32>
    %44 = vector.broadcast %41 : vector<1x128xf32> to vector<2x128xf32>
    %45 = arith.addf %43, %44 : vector<2x128xf32>
    %cst_25 = arith.constant 5.000000e-01 : f32
    %46 = vector.broadcast %cst_25 : f32 to vector<2x128xf32>
    %47 = arith.mulf %46, %45 : vector<2x128xf32>
    %48 = math.tanh %47 : vector<2x128xf32>
    %cst_26 = arith.constant 1.000000e+00 : f32
    %49 = vector.broadcast %cst_26 : f32 to vector<2x128xf32>
    %50 = arith.addf %48, %49 : vector<2x128xf32>
    %cst_27 = arith.constant 5.000000e-01 : f32
    %51 = vector.broadcast %cst_27 : f32 to vector<2x128xf32>
    %52 = arith.mulf %51, %50 : vector<2x128xf32>
    %c0_28 = arith.constant 0 : index
    %c0_29 = arith.constant 0 : index
    %53 = vector.load %arg2[%c0_28, %c0_29] : memref<768x128xbf16, #tpu.memory_space<vmem>>, vector<128x128xbf16>
    %c0_30 = arith.constant 0 : index
    %c0_31 = arith.constant 0 : index
    %54 = vector.load %arg3[%c0_30, %c0_31] : memref<6x128xf32, #tpu.memory_space<vmem>>, vector<1x128xf32>
    %55 = arith.truncf %52 : vector<2x128xf32> to vector<2x128xbf16>
    %cst_32 = arith.constant dense<0.000000e+00> : vector<2x128xf32>
    %56 = tpu.matmul %55, %53, %cst_32 {dimension_numbers = #tpu.dot_dimension_numbers<[1], [0], [0], [1], [0, 0, 1, 1], [], []>} : vector<2x128xbf16>, vector<128x128xbf16>, vector<2x128xf32> -> vector<2x128xf32>
    %57 = vector.broadcast %54 : vector<1x128xf32> to vector<2x128xf32>
    %58 = arith.addf %56, %57 : vector<2x128xf32>
    %cst_33 = arith.constant 0.000000e+00 : f32
    %59 = vector.broadcast %cst_33 : f32 to vector<2x128xf32>
    %60 = arith.maximumf %58, %59 : vector<2x128xf32>
    %c128_34 = arith.constant 128 : index
    %c0_35 = arith.constant 0 : index
    %61 = vector.load %arg2[%c128_34, %c0_35] : memref<768x128xbf16, #tpu.memory_space<vmem>>, vector<128x128xbf16>
    %c1_36 = arith.constant 1 : index
    %c0_37 = arith.constant 0 : index
    %62 = vector.load %arg3[%c1_36, %c0_37] : memref<6x128xf32, #tpu.memory_space<vmem>>, vector<1x128xf32>
    %63 = arith.truncf %60 : vector<2x128xf32> to vector<2x128xbf16>
    %cst_38 = arith.constant dense<0.000000e+00> : vector<2x128xf32>
    %64 = tpu.matmul %63, %61, %cst_38 {dimension_numbers = #tpu.dot_dimension_numbers<[1], [0], [0], [1], [0, 0, 1, 1], [], []>} : vector<2x128xbf16>, vector<128x128xbf16>, vector<2x128xf32> -> vector<2x128xf32>
    %65 = vector.broadcast %62 : vector<1x128xf32> to vector<2x128xf32>
    %66 = arith.addf %64, %65 : vector<2x128xf32>
    %cst_39 = arith.constant 0.000000e+00 : f32
    %67 = vector.broadcast %cst_39 : f32 to vector<2x128xf32>
    %68 = arith.maximumf %66, %67 : vector<2x128xf32>
    %c256_40 = arith.constant 256 : index
    %c0_41 = arith.constant 0 : index
    %69 = vector.load %arg2[%c256_40, %c0_41] : memref<768x128xbf16, #tpu.memory_space<vmem>>, vector<128x128xbf16>
    %c2_42 = arith.constant 2 : index
    %c0_43 = arith.constant 0 : index
    %70 = vector.load %arg3[%c2_42, %c0_43] : memref<6x128xf32, #tpu.memory_space<vmem>>, vector<1x128xf32>
    %71 = arith.truncf %68 : vector<2x128xf32> to vector<2x128xbf16>
    %cst_44 = arith.constant dense<0.000000e+00> : vector<2x128xf32>
    %72 = tpu.matmul %71, %69, %cst_44 {dimension_numbers = #tpu.dot_dimension_numbers<[1], [0], [0], [1], [0, 0, 1, 1], [], []>} : vector<2x128xbf16>, vector<128x128xbf16>, vector<2x128xf32> -> vector<2x128xf32>
    %73 = vector.broadcast %70 : vector<1x128xf32> to vector<2x128xf32>
    %74 = arith.addf %72, %73 : vector<2x128xf32>
    %cst_45 = arith.constant 0.000000e+00 : f32
    %75 = vector.broadcast %cst_45 : f32 to vector<2x128xf32>
    %76 = arith.maximumf %74, %75 : vector<2x128xf32>
    %c384_46 = arith.constant 384 : index
    %c0_47 = arith.constant 0 : index
    %77 = vector.load %arg2[%c384_46, %c0_47] : memref<768x128xbf16, #tpu.memory_space<vmem>>, vector<128x128xbf16>
    %c3_48 = arith.constant 3 : index
    %c0_49 = arith.constant 0 : index
    %78 = vector.load %arg3[%c3_48, %c0_49] : memref<6x128xf32, #tpu.memory_space<vmem>>, vector<1x128xf32>
    %79 = arith.truncf %76 : vector<2x128xf32> to vector<2x128xbf16>
    %cst_50 = arith.constant dense<0.000000e+00> : vector<2x128xf32>
    %80 = tpu.matmul %79, %77, %cst_50 {dimension_numbers = #tpu.dot_dimension_numbers<[1], [0], [0], [1], [0, 0, 1, 1], [], []>} : vector<2x128xbf16>, vector<128x128xbf16>, vector<2x128xf32> -> vector<2x128xf32>
    %81 = vector.broadcast %78 : vector<1x128xf32> to vector<2x128xf32>
    %82 = arith.addf %80, %81 : vector<2x128xf32>
    %cst_51 = arith.constant 0.000000e+00 : f32
    %83 = vector.broadcast %cst_51 : f32 to vector<2x128xf32>
    %84 = arith.maximumf %82, %83 : vector<2x128xf32>
    %c512_52 = arith.constant 512 : index
    %c0_53 = arith.constant 0 : index
    %85 = vector.load %arg2[%c512_52, %c0_53] : memref<768x128xbf16, #tpu.memory_space<vmem>>, vector<128x128xbf16>
    %c4_54 = arith.constant 4 : index
    %c0_55 = arith.constant 0 : index
    %86 = vector.load %arg3[%c4_54, %c0_55] : memref<6x128xf32, #tpu.memory_space<vmem>>, vector<1x128xf32>
    %87 = arith.truncf %84 : vector<2x128xf32> to vector<2x128xbf16>
    %cst_56 = arith.constant dense<0.000000e+00> : vector<2x128xf32>
    %88 = tpu.matmul %87, %85, %cst_56 {dimension_numbers = #tpu.dot_dimension_numbers<[1], [0], [0], [1], [0, 0, 1, 1], [], []>} : vector<2x128xbf16>, vector<128x128xbf16>, vector<2x128xf32> -> vector<2x128xf32>
    %89 = vector.broadcast %86 : vector<1x128xf32> to vector<2x128xf32>
    %90 = arith.addf %88, %89 : vector<2x128xf32>
    %cst_57 = arith.constant 0.000000e+00 : f32
    %91 = vector.broadcast %cst_57 : f32 to vector<2x128xf32>
    %92 = arith.maximumf %90, %91 : vector<2x128xf32>
    %c640_58 = arith.constant 640 : index
    %c0_59 = arith.constant 0 : index
    %93 = vector.load %arg2[%c640_58, %c0_59] : memref<768x128xbf16, #tpu.memory_space<vmem>>, vector<128x128xbf16>
    %c5_60 = arith.constant 5 : index
    %c0_61 = arith.constant 0 : index
    %94 = vector.load %arg3[%c5_60, %c0_61] : memref<6x128xf32, #tpu.memory_space<vmem>>, vector<1x128xf32>
    %95 = arith.truncf %92 : vector<2x128xf32> to vector<2x128xbf16>
    %cst_62 = arith.constant dense<0.000000e+00> : vector<2x128xf32>
    %96 = tpu.matmul %95, %93, %cst_62 {dimension_numbers = #tpu.dot_dimension_numbers<[1], [0], [0], [1], [0, 0, 1, 1], [], []>} : vector<2x128xbf16>, vector<128x128xbf16>, vector<2x128xf32> -> vector<2x128xf32>
    %97 = vector.broadcast %94 : vector<1x128xf32> to vector<2x128xf32>
    %98 = arith.addf %96, %97 : vector<2x128xf32>
    %cst_63 = arith.constant 5.000000e-01 : f32
    %99 = vector.broadcast %cst_63 : f32 to vector<2x128xf32>
    %100 = arith.mulf %99, %98 : vector<2x128xf32>
    %101 = math.tanh %100 : vector<2x128xf32>
    %cst_64 = arith.constant 1.000000e+00 : f32
    %102 = vector.broadcast %cst_64 : f32 to vector<2x128xf32>
    %103 = arith.addf %101, %102 : vector<2x128xf32>
    %cst_65 = arith.constant 5.000000e-01 : f32
    %104 = vector.broadcast %cst_65 : f32 to vector<2x128xf32>
    %105 = arith.mulf %104, %103 : vector<2x128xf32>
    %c0_66 = arith.constant 0 : index
    %c0_67 = arith.constant 0 : index
    %106 = vector.load %arg4[%c0_66, %c0_67] : memref<2x256xf32, #tpu.memory_space<vmem>>, vector<2x128xf32>
    tpu.vector_store %arg4[%c0_66, %c0_67], %52 {strides = array<i32>} : memref<2x256xf32, #tpu.memory_space<vmem>>, vector<2x128xf32>,
    %c0_68 = arith.constant 0 : index
    %c128_69 = arith.constant 128 : index
    %107 = vector.load %arg4[%c0_68, %c128_69] : memref<2x256xf32, #tpu.memory_space<vmem>>, vector<2x128xf32>
    tpu.vector_store %arg4[%c0_68, %c128_69], %105 {strides = array<i32>} : memref<2x256xf32, #tpu.memory_space<vmem>>, vector<2x128xf32>,
    return
  }
  func.func @transform_0(%arg0: i32) -> (i32, i32) {
    %c0_i32 = arith.constant 0 : i32
    %c0_i32_0 = arith.constant 0 : i32
    return %arg0, %c0_i32 : i32, i32
  }
  func.func @transform_1(%arg0: i32) -> (i32, i32) {
    %c0_i32 = arith.constant 0 : i32
    %c0_i32_0 = arith.constant 0 : i32
    %c0_i32_1 = arith.constant 0 : i32
    return %c0_i32, %c0_i32_0 : i32, i32
  }
  func.func @transform_2(%arg0: i32) -> (i32, i32) {
    %c0_i32 = arith.constant 0 : i32
    %c0_i32_0 = arith.constant 0 : i32
    %c0_i32_1 = arith.constant 0 : i32
    return %c0_i32, %c0_i32_0 : i32, i32
  }
  func.func @transform_3(%arg0: i32) -> (i32, i32) {
    %c0_i32 = arith.constant 0 : i32
    %c0_i32_0 = arith.constant 0 : i32
    return %arg0, %c0_i32 : i32, i32
  }
}

</mosaic_0001>

<llo_original>
// kernel: usad_forward_packed.1
$region0: #{usad_forward_packed.1}
  #allocation0 [shape = 'u32[]', space=smem, size = 0x4, offset = 0x4, fixed_abs, tag = 'smem constant byte address 0x4 - core index']
  #allocation1 [shape = 'u32[72,128]{1,0:T(1,128)}', space=vmem, size = 0x9000, scoped, tag = 'internal scratch']
  %s0 = inlined_call_operand.vmem [shape: bf16[2,32], index: 0, kind: input, shape index: {}]
  %s1 = inlined_call_operand.hbm [shape: bf16[768,128], index: 1, kind: input, shape index: {}]
  %s2 = inlined_call_operand.vmem [shape: f32[6,128], index: 2, kind: input, shape index: {}]
  %s3 = inlined_call_operand.vmem [shape: f32[2,256], index: 3, kind: output, shape index: {}]
  %s4 = sld [smem:[#allocation0]]
  $region26: #{usad_forward_packed.1} parent=0
    _
  %s6 = ssub.s32 1, %s4
  %s7 = scalar_select 0, %s6, %s4
  $region1: #{usad_forward_packed.1} parent=0
    #allocation2 [shape = 'u8[196608]{0}', space=vmem, size = 0x30000, scoped, tag = 'input window, operand 1, single buffered']
    #allocation3 [shape = 's32[1]{0}', space=sflag, size = 0x4, scoped, tag = 'scoped memory for usad_forward_packed.1']
    %8 = vsyncpa [#allocation3], 0
    // Predicated region
    $region2: #{usad_forward_packed.1} parent=1 // pred_check
      _
    $region3: #{usad_forward_packed.1} parent=1 // pred_check_branch
      %10 = sbr.rel (0) target = $region5
    $region4: #{usad_forward_packed.1} parent=1 // pred_region
      _
    $region5: #{usad_forward_packed.1} parent=1 // pred_fallthru
      _
    // Predicated region
    $region6: #{usad_forward_packed.1} parent=1 // pred_check
      _
    $region7: #{usad_forward_packed.1} parent=1 // pred_check_branch
      %12 = sbr.rel (0) target = $region9
    $region8: #{usad_forward_packed.1} parent=1 // pred_region
      %14 = vsyncadd [#allocation3], 0
      %s15 = sshll.u32 %s1, 4
      %s16 = int_to_ptr.hbm [resolvable:$true] %s15
      %s17 = sshll.u32 [#allocation2], 4
      %s18 = int_to_ptr.vmem [resolvable:$true] %s17
      %23 = dma.hbm_to_vmem [thread:$0]  %s16, 6144, %s18, [#allocation3], 64, 64, 4
    $region9: #{usad_forward_packed.1} parent=1 // pred_fallthru
      _
    // Predicated region
    $region10: #{usad_forward_packed.1} parent=1 // pred_check
      _
    $region11: #{usad_forward_packed.1} parent=1 // pred_check_branch
      %25 = sbr.rel (0) target = $region13
    $region12: #{usad_forward_packed.1} parent=1 // pred_region
      _
    $region13: #{usad_forward_packed.1} parent=1 // pred_fallthru
      _
    // Predicated region
    $region14: #{usad_forward_packed.1} parent=1 // pred_check
      _
    $region15: #{usad_forward_packed.1} parent=1 // pred_check_branch
      %27 = sbr.rel (0) target = $region17
    $region16: #{usad_forward_packed.1} parent=1 // pred_region
      %29 = dma.done [#allocation3], 6144
    $region17: #{usad_forward_packed.1} parent=1 // pred_fallthru
      _
    %v31 = vld [vmem:[%s0] sm:$0x1]
    %v32 = vld [vmem:[#allocation2] sm:$0xf]
    %v33 = vld [vmem:[#allocation2 + $0x4] sm:$0xf]
    %v34 = vld [vmem:[#allocation2 + $0x8] sm:$0xf]
    %v35 = vld [vmem:[#allocation2 + $0xc] sm:$0xf]
    %v36 = vld [vmem:[%s2] sm:$0x1]
    %v37 = vperm.slane %v36, 0
    %v42 = vunpack.c.l.b16 %v32
    %v43 = vunpack.c.l.b16 %v33
    %v44 = vunpack.c.l.b16 %v34
    %v45 = vunpack.c.l.b16 %v35
    %v46 = vpack.c.b16 %v43, %v42
    %v47 = vpack.c.b16 %v45, %v44
    %vm50 = vcmask 261120
    %v52 = vsel %vm50, %v31, 0
    %54 = vmatpush.bf16.msra.mxu0 0
    %55 = vmatpush.bf16.msra.mxu0 0
    %56 = vmatpush.bf16.msra.mxu0 0
    %57 = vmatpush.bf16.msra.mxu0 0
    %58 = vmatpush.bf16.msra.mxu0 0
    %59 = vmatpush.bf16.msra.mxu0 0
    %60 = vmatpush.bf16.msra.mxu0 %v47
    %61 = vmatpush.bf16.msra.mxu0 %v46
    %62 = vmatmul.bf16.gmra.mxu0 %v52
    %v63 = vpop.f32.mrf.mxu0
    %v64 = vadd.f32 %v37, %v63
    %v65 = vpop.f32.mrf.mxu0
    %66 = vdwg.mxu0
    %v67 = vmax.f32 %v64, 0.0
    %v68 = vld [vmem:[#allocation2 + $0x40] sm:$0xf]
    %v69 = vld [vmem:[#allocation2 + $0x44] sm:$0xf]
    %v70 = vld [vmem:[#allocation2 + $0x48] sm:$0xf]
    %v71 = vld [vmem:[#allocation2 + $0x4c] sm:$0xf]
    %v72 = vld [vmem:[#allocation2 + $0x50] sm:$0xf]
    %v73 = vld [vmem:[#allocation2 + $0x54] sm:$0xf]
    %v74 = vld [vmem:[#allocation2 + $0x58] sm:$0xf]
    %v75 = vld [vmem:[#allocation2 + $0x5c] sm:$0xf]
    %v76 = vld [vmem:[#allocation2 + $0x60] sm:$0xf]
    %v77 = vld [vmem:[#allocation2 + $0x64] sm:$0xf]
    %v78 = vld [vmem:[#allocation2 + $0x68] sm:$0xf]
    %v79 = vld [vmem:[#allocation2 + $0x6c] sm:$0xf]
    %v80 = vld [vmem:[#allocation2 + $0x70] sm:$0xf]
    %v81 = vld [vmem:[#allocation2 + $0x74] sm:$0xf]
    %v82 = vld [vmem:[#allocation2 + $0x78] sm:$0xf]
    %v83 = vld [vmem:[#allocation2 + $0x7c] sm:$0xf]
    %v84 = vld [vmem:[%s2 + $0x1] sm:$0x1]
    %v85 = vpack.c.bf16 %v67, %v67
    %v86 = vperm.slane %v84, 0
    %v103 = vunpack.c.l.b16 %v68
    %v104 = vunpack.c.l.b16 %v69
    %v105 = vunpack.c.l.b16 %v70
    %v106 = vunpack.c.l.b16 %v71
    %v107 = vunpack.c.l.b16 %v72
    %v108 = vunpack.c.l.b16 %v73
    %v109 = vunpack.c.l.b16 %v74
    %v110 = vunpack.c.l.b16 %v75
    %v111 = vunpack.c.l.b16 %v76
    %v112 = vunpack.c.l.b16 %v77
    %v113 = vunpack.c.l.b16 %v78
    %v114 = vunpack.c.l.b16 %v79
    %v115 = vunpack.c.l.b16 %v80
    %v116 = vunpack.c.l.b16 %v81
    %v117 = vunpack.c.l.b16 %v82
    %v118 = vunpack.c.l.b16 %v83
    %v119 = vpack.c.b16 %v104, %v103
    %v120 = vpack.c.b16 %v106, %v105
    %v121 = vpack.c.b16 %v108, %v107
    %v122 = vpack.c.b16 %v110, %v109
    %v123 = vpack.c.b16 %v112, %v111
    %v124 = vpack.c.b16 %v114, %v113
    %v125 = vpack.c.b16 %v116, %v115
    %v126 = vpack.c.b16 %v118, %v117
    %135 = vmatpush.bf16.msra.mxu0 %v126
    %136 = vmatpush.bf16.msra.mxu0 %v125
    %137 = vmatpush.bf16.msra.mxu0 %v124
    %138 = vmatpush.bf16.msra.mxu0 %v123
    %139 = vmatpush.bf16.msra.mxu0 %v122
    %140 = vmatpush.bf16.msra.mxu0 %v121
    %141 = vmatpush.bf16.msra.mxu0 %v120
    %142 = vmatpush.bf16.msra.mxu0 %v119
    %143 = vmatmul.bf16.gmra.mxu0 %v85
    %v144 = vpop.f32.mrf.mxu0
    %v145 = vadd.f32 %v86, %v144
    %v146 = vpop.f32.mrf.mxu0
    %147 = vdwg.mxu0
    %v148 = vmax.f32 %v145, 0.0
    %v149 = vld [vmem:[#allocation2 + $0x80] sm:$0xf]
    %v150 = vld [vmem:[#allocation2 + $0x84] sm:$0xf]
    %v151 = vld [vmem:[#allocation2 + $0x88] sm:$0xf]
    %v152 = vld [vmem:[#allocation2 + $0x8c] sm:$0xf]
    %v153 = vld [vmem:[#allocation2 + $0x90] sm:$0xf]
    %v154 = vld [vmem:[#allocation2 + $0x94] sm:$0xf]
    %v155 = vld [vmem:[#allocation2 + $0x98] sm:$0xf]
    %v156 = vld [vmem:[#allocation2 + $0x9c] sm:$0xf]
    %v157 = vld [vmem:[#allocation2 + $0xa0] sm:$0xf]
    %v158 = vld [vmem:[#allocation2 + $0xa4] sm:$0xf]
    %v159 = vld [vmem:[#allocation2 + $0xa8] sm:$0xf]
    %v160 = vld [vmem:[#allocation2 + $0xac] sm:$0xf]
    %v161 = vld [vmem:[#allocation2 + $0xb0] sm:$0xf]
    %v162 = vld [vmem:[#allocation2 + $0xb4] sm:$0xf]
    %v163 = vld [vmem:[#allocation2 + $0xb8] sm:$0xf]
    %v164 = vld [vmem:[#allocation2 + $0xbc] sm:$0xf]
    %v165 = vld [vmem:[%s2 + $0x2] sm:$0x1]
    %v166 = vpack.c.bf16 %v148, %v148
    %v167 = vperm.slane %v165, 0
    %v184 = vunpack.c.l.b16 %v149
    %v185 = vunpack.c.l.b16 %v150
    %v186 = vunpack.c.l.b16 %v151
    %v187 = vunpack.c.l.b16 %v152
    %v188 = vunpack.c.l.b16 %v153
    %v189 = vunpack.c.l.b16 %v154
    %v190 = vunpack.c.l.b16 %v155
    %v191 = vunpack.c.l.b16 %v156
    %v192 = vunpack.c.l.b16 %v157
    %v193 = vunpack.c.l.b16 %v158
    %v194 = vunpack.c.l.b16 %v159
    %v195 = vunpack.c.l.b16 %v160
    %v196 = vunpack.c.l.b16 %v161
    %v197 = vunpack.c.l.b16 %v162
    %v198 = vunpack.c.l.b16 %v163
    %v199 = vunpack.c.l.b16 %v164
    %v200 = vpack.c.b16 %v185, %v184
    %v201 = vpack.c.b16 %v187, %v186
    %v202 = vpack.c.b16 %v189, %v188
    %v203 = vpack.c.b16 %v191, %v190
    %v204 = vpack.c.b16 %v193, %v192
    %v205 = vpack.c.b16 %v195, %v194
    %v206 = vpack.c.b16 %v197, %v196
    %v207 = vpack.c.b16 %v199, %v198
    %216 = vmatpush.bf16.msra.mxu0 %v207
    %217 = vmatpush.bf16.msra.mxu0 %v206
    %218 = vmatpush.bf16.msra.mxu0 %v205
    %219 = vmatpush.bf16.msra.mxu0 %v204
    %220 = vmatpush.bf16.msra.mxu0 %v203
    %221 = vmatpush.bf16.msra.mxu0 %v202
    %222 = vmatpush.bf16.msra.mxu0 %v201
    %223 = vmatpush.bf16.msra.mxu0 %v200
    %224 = vmatmul.bf16.gmra.mxu0 %v166
    %v225 = vpop.f32.mrf.mxu0
    %v226 = vadd.f32 %v167, %v225
    %v227 = vpop.f32.mrf.mxu0
    %228 = vdwg.mxu0
    %v229 = vmax.f32 %v226, 0.0
    %v230 = vld [vmem:[#allocation2 + $0xc0] sm:$0xf]
    %v231 = vld [vmem:[#allocation2 + $0xc4] sm:$0xf]
    %v232 = vld [vmem:[#allocation2 + $0xc8] sm:$0xf]
    %v233 = vld [vmem:[#allocation2 + $0xcc] sm:$0xf]
    %v234 = vld [vmem:[#allocation2 + $0xd0] sm:$0xf]
    %v235 = vld [vmem:[#allocation2 + $0xd4] sm:$0xf]
    %v236 = vld [vmem:[#allocation2 + $0xd8] sm:$0xf]
    %v237 = vld [vmem:[#allocation2 + $0xdc] sm:$0xf]
    %v238 = vld [vmem:[#allocation2 + $0xe0] sm:$0xf]
    %v239 = vld [vmem:[#allocation2 + $0xe4] sm:$0xf]
    %v240 = vld [vmem:[#allocation2 + $0xe8] sm:$0xf]
    %v241 = vld [vmem:[#allocation2 + $0xec] sm:$0xf]
    %v242 = vld [vmem:[#allocation2 + $0xf0] sm:$0xf]
    %v243 = vld [vmem:[#allocation2 + $0xf4] sm:$0xf]
    %v244 = vld [vmem:[#allocation2 + $0xf8] sm:$0xf]
    %v245 = vld [vmem:[#allocation2 + $0xfc] sm:$0xf]
    %v246 = vld [vmem:[%s2 + $0x3] sm:$0x1]
    %v247 = vpack.c.bf16 %v229, %v229
    %v248 = vperm.slane %v246, 0
    %v265 = vunpack.c.l.b16 %v230
    %v266 = vunpack.c.l.b16 %v231
    %v267 = vunpack.c.l.b16 %v232
    %v268 = vunpack.c.l.b16 %v233
    %v269 = vunpack.c.l.b16 %v234
    %v270 = vunpack.c.l.b16 %v235
    %v271 = vunpack.c.l.b16 %v236
    %v272 = vunpack.c.l.b16 %v237
    %v273 = vunpack.c.l.b16 %v238
    %v274 = vunpack.c.l.b16 %v239
    %v275 = vunpack.c.l.b16 %v240
    %v276 = vunpack.c.l.b16 %v241
    %v277 = vunpack.c.l.b16 %v242
    %v278 = vunpack.c.l.b16 %v243
    %v279 = vunpack.c.l.b16 %v244
    %v280 = vunpack.c.l.b16 %v245
    %v281 = vpack.c.b16 %v266, %v265
    %v282 = vpack.c.b16 %v268, %v267
    %v283 = vpack.c.b16 %v270, %v269
    %v284 = vpack.c.b16 %v272, %v271
    %v285 = vpack.c.b16 %v274, %v273
    %v286 = vpack.c.b16 %v276, %v275
    %v287 = vpack.c.b16 %v278, %v277
    %v288 = vpack.c.b16 %v280, %v279
    %297 = vmatpush.bf16.msra.mxu0 %v288
    %298 = vmatpush.bf16.msra.mxu0 %v287
    %299 = vmatpush.bf16.msra.mxu0 %v286
    %300 = vmatpush.bf16.msra.mxu0 %v285
    %301 = vmatpush.bf16.msra.mxu0 %v284
    %302 = vmatpush.bf16.msra.mxu0 %v283
    %303 = vmatpush.bf16.msra.mxu0 %v282
    %304 = vmatpush.bf16.msra.mxu0 %v281
    %305 = vmatmul.bf16.gmra.mxu0 %v247
    %v306 = vpop.f32.mrf.mxu0
    %v307 = vadd.f32 %v248, %v306
    %v308 = vpop.f32.mrf.mxu0
    %309 = vdwg.mxu0
    %v310 = vmax.f32 %v307, 0.0
    %v311 = vld [vmem:[#allocation2 + $0x100] sm:$0xf]
    %v312 = vld [vmem:[#allocation2 + $0x104] sm:$0xf]
    %v313 = vld [vmem:[#allocation2 + $0x108] sm:$0xf]
    %v314 = vld [vmem:[#allocation2 + $0x10c] sm:$0xf]
    %v315 = vld [vmem:[#allocation2 + $0x110] sm:$0xf]
    %v316 = vld [vmem:[#allocation2 + $0x114] sm:$0xf]
    %v317 = vld [vmem:[#allocation2 + $0x118] sm:$0xf]
    %v318 = vld [vmem:[#allocation2 + $0x11c] sm:$0xf]
    %v319 = vld [vmem:[#allocation2 + $0x120] sm:$0xf]
    %v320 = vld [vmem:[#allocation2 + $0x124] sm:$0xf]
    %v321 = vld [vmem:[#allocation2 + $0x128] sm:$0xf]
    %v322 = vld [vmem:[#allocation2 + $0x12c] sm:$0xf]
    %v323 = vld [vmem:[#allocation2 + $0x130] sm:$0xf]
    %v324 = vld [vmem:[#allocation2 + $0x134] sm:$0xf]
    %v325 = vld [vmem:[#allocation2 + $0x138] sm:$0xf]
    %v326 = vld [vmem:[#allocation2 + $0x13c] sm:$0xf]
    %v327 = vld [vmem:[%s2 + $0x4] sm:$0x1]
    %v328 = vpack.c.bf16 %v310, %v310
    %v329 = vperm.slane %v327, 0
    %v346 = vunpack.c.l.b16 %v311
    %v347 = vunpack.c.l.b16 %v312
    %v348 = vunpack.c.l.b16 %v313
    %v349 = vunpack.c.l.b16 %v314
    %v350 = vunpack.c.l.b16 %v315
    %v351 = vunpack.c.l.b16 %v316
    %v352 = vunpack.c.l.b16 %v317
    %v353 = vunpack.c.l.b16 %v318
    %v354 = vunpack.c.l.b16 %v319
    %v355 = vunpack.c.l.b16 %v320
    %v356 = vunpack.c.l.b16 %v321
    %v357 = vunpack.c.l.b16 %v322
    %v358 = vunpack.c.l.b16 %v323
    %v359 = vunpack.c.l.b16 %v324
    %v360 = vunpack.c.l.b16 %v325
    %v361 = vunpack.c.l.b16 %v326
    %v362 = vpack.c.b16 %v347, %v346
    %v363 = vpack.c.b16 %v349, %v348
    %v364 = vpack.c.b16 %v351, %v350
    %v365 = vpack.c.b16 %v353, %v352
    %v366 = vpack.c.b16 %v355, %v354
    %v367 = vpack.c.b16 %v357, %v356
    %v368 = vpack.c.b16 %v359, %v358
    %v369 = vpack.c.b16 %v361, %v360
    %378 = vmatpush.bf16.msra.mxu0 %v369
    %379 = vmatpush.bf16.msra.mxu0 %v368
    %380 = vmatpush.bf16.msra.mxu0 %v367
    %381 = vmatpush.bf16.msra.mxu0 %v366
    %382 = vmatpush.bf16.msra.mxu0 %v365
    %383 = vmatpush.bf16.msra.mxu0 %v364
    %384 = vmatpush.bf16.msra.mxu0 %v363
    %385 = vmatpush.bf16.msra.mxu0 %v362
    %386 = vmatmul.bf16.gmra.mxu0 %v328
    %v387 = vpop.f32.mrf.mxu0
    %v388 = vadd.f32 %v329, %v387
    %v389 = vpop.f32.mrf.mxu0
    %390 = vdwg.mxu0
    %v391 = vmax.f32 %v388, 0.0
    %v392 = vld [vmem:[#allocation2 + $0x140] sm:$0xf]
    %v393 = vld [vmem:[#allocation2 + $0x144] sm:$0xf]
    %v394 = vld [vmem:[#allocation2 + $0x148] sm:$0xf]
    %v395 = vld [vmem:[#allocation2 + $0x14c] sm:$0xf]
    %v396 = vld [vmem:[#allocation2 + $0x150] sm:$0xf]
    %v397 = vld [vmem:[#allocation2 + $0x154] sm:$0xf]
    %v398 = vld [vmem:[#allocation2 + $0x158] sm:$0xf]
    %v399 = vld [vmem:[#allocation2 + $0x15c] sm:$0xf]
    %v400 = vld [vmem:[#allocation2 + $0x160] sm:$0xf]
    %v401 = vld [vmem:[#allocation2 + $0x164] sm:$0xf]
    %v402 = vld [vmem:[#allocation2 + $0x168] sm:$0xf]
    %v403 = vld [vmem:[#allocation2 + $0x16c] sm:$0xf]
    %v404 = vld [vmem:[#allocation2 + $0x170] sm:$0xf]
    %v405 = vld [vmem:[#allocation2 + $0x174] sm:$0xf]
    %v406 = vld [vmem:[#allocation2 + $0x178] sm:$0xf]
    %v407 = vld [vmem:[#allocation2 + $0x17c] sm:$0xf]
    %v408 = vld [vmem:[%s2 + $0x5] sm:$0x1]
    %v409 = vpack.c.bf16 %v391, %v391
    %v410 = vperm.slane %v408, 0
    %v427 = vunpack.c.l.b16 %v392
    %v428 = vunpack.c.l.b16 %v393
    %v429 = vunpack.c.l.b16 %v394
    %v430 = vunpack.c.l.b16 %v395
    %v431 = vunpack.c.l.b16 %v396
    %v432 = vunpack.c.l.b16 %v397
    %v433 = vunpack.c.l.b16 %v398
    %v434 = vunpack.c.l.b16 %v399
    %v435 = vunpack.c.l.b16 %v400
    %v436 = vunpack.c.l.b16 %v401
    %v437 = vunpack.c.l.b16 %v402
    %v438 = vunpack.c.l.b16 %v403
    %v439 = vunpack.c.l.b16 %v404
    %v440 = vunpack.c.l.b16 %v405
    %v441 = vunpack.c.l.b16 %v406
    %v442 = vunpack.c.l.b16 %v407
    %v443 = vpack.c.b16 %v428, %v427
    %v444 = vpack.c.b16 %v430, %v429
    %v445 = vpack.c.b16 %v432, %v431
    %v446 = vpack.c.b16 %v434, %v433
    %v447 = vpack.c.b16 %v436, %v435
    %v448 = vpack.c.b16 %v438, %v437
    %v449 = vpack.c.b16 %v440, %v439
    %v450 = vpack.c.b16 %v442, %v441
    %459 = vmatpush.bf16.msra.mxu0 %v450
    %460 = vmatpush.bf16.msra.mxu0 %v449
    %461 = vmatpush.bf16.msra.mxu0 %v448
    %462 = vmatpush.bf16.msra.mxu0 %v447
    %463 = vmatpush.bf16.msra.mxu0 %v446
    %464 = vmatpush.bf16.msra.mxu0 %v445
    %465 = vmatpush.bf16.msra.mxu0 %v444
    %466 = vmatpush.bf16.msra.mxu0 %v443
    %467 = vmatmul.bf16.gmra.mxu0 %v409
    %v468 = vpop.f32.mrf.mxu0
    %v469 = vadd.f32 %v410, %v468
    %v470 = vpop.f32.mrf.mxu0
    %471 = vdwg.mxu0
    %v472 = vmul.f32 %v469, 0.5
    %v473 = vtanh.pop %v472
    %v474 = vadd.f32 %v473, 1.0
    %v475 = vmul.f32 %v474, 0.5
    %v476 = vld [vmem:[#allocation2] sm:$0xf]
    %v477 = vld [vmem:[#allocation2 + $0x4] sm:$0xf]
    %v478 = vld [vmem:[#allocation2 + $0x8] sm:$0xf]
    %v479 = vld [vmem:[#allocation2 + $0xc] sm:$0xf]
    %v480 = vld [vmem:[#allocation2 + $0x10] sm:$0xf]
    %v481 = vld [vmem:[#allocation2 + $0x14] sm:$0xf]
    %v482 = vld [vmem:[#allocation2 + $0x18] sm:$0xf]
    %v483 = vld [vmem:[#allocation2 + $0x1c] sm:$0xf]
    %v484 = vld [vmem:[#allocation2 + $0x20] sm:$0xf]
    %v485 = vld [vmem:[#allocation2 + $0x24] sm:$0xf]
    %v486 = vld [vmem:[#allocation2 + $0x28] sm:$0xf]
    %v487 = vld [vmem:[#allocation2 + $0x2c] sm:$0xf]
    %v488 = vld [vmem:[#allocation2 + $0x30] sm:$0xf]
    %v489 = vld [vmem:[#allocation2 + $0x34] sm:$0xf]
    %v490 = vld [vmem:[#allocation2 + $0x38] sm:$0xf]
    %v491 = vld [vmem:[#allocation2 + $0x3c] sm:$0xf]
    %v492 = vpack.c.bf16 %v475, %v475
    %v509 = vunpack.c.l.b16 %v476
    %v510 = vunpack.c.l.b16 %v477
    %v511 = vunpack.c.l.b16 %v478
    %v512 = vunpack.c.l.b16 %v479
    %v513 = vunpack.c.l.b16 %v480
    %v514 = vunpack.c.l.b16 %v481
    %v515 = vunpack.c.l.b16 %v482
    %v516 = vunpack.c.l.b16 %v483
    %v517 = vunpack.c.l.b16 %v484
    %v518 = vunpack.c.l.b16 %v485
    %v519 = vunpack.c.l.b16 %v486
    %v520 = vunpack.c.l.b16 %v487
    %v521 = vunpack.c.l.b16 %v488
    %v522 = vunpack.c.l.b16 %v489
    %v523 = vunpack.c.l.b16 %v490
    %v524 = vunpack.c.l.b16 %v491
    %v525 = vpack.c.b16 %v510, %v509
    %v526 = vpack.c.b16 %v512, %v511
    %v527 = vpack.c.b16 %v514, %v513
    %v528 = vpack.c.b16 %v516, %v515
    %v529 = vpack.c.b16 %v518, %v517
    %v530 = vpack.c.b16 %v520, %v519
    %v531 = vpack.c.b16 %v522, %v521
    %v532 = vpack.c.b16 %v524, %v523
    %541 = vmatpush.bf16.msra.mxu0 %v532
    %542 = vmatpush.bf16.msra.mxu0 %v531
    %543 = vmatpush.bf16.msra.mxu0 %v530
    %544 = vmatpush.bf16.msra.mxu0 %v529
    %545 = vmatpush.bf16.msra.mxu0 %v528
    %546 = vmatpush.bf16.msra.mxu0 %v527
    %547 = vmatpush.bf16.msra.mxu0 %v526
    %548 = vmatpush.bf16.msra.mxu0 %v525
    %549 = vmatmul.bf16.gmra.mxu0 %v492
    %v550 = vpop.f32.mrf.mxu0
    %v551 = vadd.f32 %v37, %v550
    %v552 = vpop.f32.mrf.mxu0
    %553 = vdwg.mxu0
    %v554 = vmax.f32 %v551, 0.0
    %v555 = vpack.c.bf16 %v554, %v554
    %556 = vmatpush.bf16.msra.mxu0 %v126
    %557 = vmatpush.bf16.msra.mxu0 %v125
    %558 = vmatpush.bf16.msra.mxu0 %v124
    %559 = vmatpush.bf16.msra.mxu0 %v123
    %560 = vmatpush.bf16.msra.mxu0 %v122
    %561 = vmatpush.bf16.msra.mxu0 %v121
    %562 = vmatpush.bf16.msra.mxu0 %v120
    %563 = vmatpush.bf16.msra.mxu0 %v119
    %564 = vmatmul.bf16.gmra.mxu0 %v555
    %v565 = vpop.f32.mrf.mxu0
    %v566 = vadd.f32 %v86, %v565
    %v567 = vpop.f32.mrf.mxu0
    %568 = vdwg.mxu0
    %v569 = vmax.f32 %v566, 0.0
    %v570 = vpack.c.bf16 %v569, %v569
    %571 = vmatpush.bf16.msra.mxu0 %v207
    %572 = vmatpush.bf16.msra.mxu0 %v206
    %573 = vmatpush.bf16.msra.mxu0 %v205
    %574 = vmatpush.bf16.msra.mxu0 %v204
    %575 = vmatpush.bf16.msra.mxu0 %v203
    %576 = vmatpush.bf16.msra.mxu0 %v202
    %577 = vmatpush.bf16.msra.mxu0 %v201
    %578 = vmatpush.bf16.msra.mxu0 %v200
    %579 = vmatmul.bf16.gmra.mxu0 %v570
    %v580 = vpop.f32.mrf.mxu0
    %v581 = vadd.f32 %v167, %v580
    %v582 = vpop.f32.mrf.mxu0
    %583 = vdwg.mxu0
    %v584 = vmax.f32 %v581, 0.0
    %v585 = vpack.c.bf16 %v584, %v584
    %586 = vmatpush.bf16.msra.mxu0 %v288
    %587 = vmatpush.bf16.msra.mxu0 %v287
    %588 = vmatpush.bf16.msra.mxu0 %v286
    %589 = vmatpush.bf16.msra.mxu0 %v285
    %590 = vmatpush.bf16.msra.mxu0 %v284
    %591 = vmatpush.bf16.msra.mxu0 %v283
    %592 = vmatpush.bf16.msra.mxu0 %v282
    %593 = vmatpush.bf16.msra.mxu0 %v281
    %594 = vmatmul.bf16.gmra.mxu0 %v585
    %v595 = vpop.f32.mrf.mxu0
    %v596 = vadd.f32 %v248, %v595
    %v597 = vpop.f32.mrf.mxu0
    %598 = vdwg.mxu0
    %v599 = vmax.f32 %v596, 0.0
    %v600 = vpack.c.bf16 %v599, %v599
    %601 = vmatpush.bf16.msra.mxu0 %v369
    %602 = vmatpush.bf16.msra.mxu0 %v368
    %603 = vmatpush.bf16.msra.mxu0 %v367
    %604 = vmatpush.bf16.msra.mxu0 %v366
    %605 = vmatpush.bf16.msra.mxu0 %v365
    %606 = vmatpush.bf16.msra.mxu0 %v364
    %607 = vmatpush.bf16.msra.mxu0 %v363
    %608 = vmatpush.bf16.msra.mxu0 %v362
    %609 = vmatmul.bf16.gmra.mxu0 %v600
    %v610 = vpop.f32.mrf.mxu0
    %v611 = vadd.f32 %v329, %v610
    %v612 = vpop.f32.mrf.mxu0
    %613 = vdwg.mxu0
    %v614 = vmax.f32 %v611, 0.0
    %v615 = vpack.c.bf16 %v614, %v614
    %616 = vmatpush.bf16.msra.mxu0 %v450
    %617 = vmatpush.bf16.msra.mxu0 %v449
    %618 = vmatpush.bf16.msra.mxu0 %v448
    %619 = vmatpush.bf16.msra.mxu0 %v447
    %620 = vmatpush.bf16.msra.mxu0 %v446
    %621 = vmatpush.bf16.msra.mxu0 %v445
    %622 = vmatpush.bf16.msra.mxu0 %v444
    %623 = vmatpush.bf16.msra.mxu0 %v443
    %624 = vmatmul.bf16.gmra.mxu0 %v615
    %v625 = vpop.f32.mrf.mxu0
    %v626 = vadd.f32 %v410, %v625
    %v627 = vpop.f32.mrf.mxu0
    %628 = vdwg.mxu0
    %v629 = vmul.f32 %v626, 0.5
    %v630 = vtanh.pop %v629
    %v631 = vadd.f32 %v630, 1.0
    %v632 = vmul.f32 %v631, 0.5
    %633 = vst [vmem:[%s3] sm:$0x3] %v475
    %634 = vst [vmem:[%s3 + $0x2] sm:$0x3] %v632
    // Predicated region
    $region18: #{usad_forward_packed.1} parent=1 // pred_check
      _
    $region19: #{usad_forward_packed.1} parent=1 // pred_check_branch
      %636 = sbr.rel (0) target = $region21
    $region20: #{usad_forward_packed.1} parent=1 // pred_region
      _
    $region21: #{usad_forward_packed.1} parent=1 // pred_fallthru
      _
    // Predicated region
    $region22: #{usad_forward_packed.1} parent=1 // pred_check
      _
    $region23: #{usad_forward_packed.1} parent=1 // pred_check_branch
      %638 = sbr.rel (0) target = $region25
    $region24: #{usad_forward_packed.1} parent=1 // pred_region
      _
    $region25: #{usad_forward_packed.1} parent=1 // pred_fallthru
      _
    %639 = vsyncpa [#allocation3], 1

</llo_original>
